<compile_context>
chip_gen: v6e
topology: v6e:2x2x1
jax: 0.10.0
libtpu: 0.0.40
codegen_flags: <defaults>
</compile_context>

<pallas_src>
from functools import partial

import numpy as np

import jax
import jax.numpy as jnp
from jax.experimental import pallas as pl
from jax.experimental.pallas import tpu as pltpu

EPS = 1e-5  # torch InstanceNorm1d default eps


def _round_up(x, m):
    return ((x + m - 1) // m) * m


def _moving_avg_matrix(T, kernel_size):
    """T x T matrix A with trend = A @ x for the replicate-pad moving average."""
    pad = (kernel_size - 1) // 2
    A = np.zeros((T, T), dtype=np.float32)
    inv_k = 1.0 / kernel_size
    for t in range(T):
        for j in range(kernel_size):
            s = min(max(t + j - pad, 0), T - 1)
            A[t, s] += inv_k
    return jnp.asarray(A)


def _dlinear_kernel(cand_ref, bands_ref, w_big_ref, w_stats_ref,
                    w_cand_ref, w_band_ref, pred_ref):
    """Batched DLinear forward, batch on the lane axis.

    cand_ref   : (C*T, TB)     raw per-channel time series (row = c*T + t)
    bands_ref  : (3L+1, TB)    [center, upper, lower, ones] lookback features
    w_big_ref  : (C*P+C, C*T)  block-diag mean-centered encoder weight; the
                               last C rows compute the per-channel time mean
    w_stats_ref: (C, C*T)      block 1/T rows (per-channel time average)
    w_cand_ref : (O, C*P)      predictor weights for the candle block
    w_band_ref : (O, 3L+1)     predictor weights for bands, bias in last column
    pred_ref   : (O, TB)       output
    """
    C = w_stats_ref.shape[0]
    CP = w_cand_ref.shape[1]
    P = CP // C

    x = cand_ref[...]                                          # (C*T, TB)

    # One fused MXU matmul: centered encoder outputs for all channels plus
    # the per-channel time means (rows CP .. CP+C-1).
    y = jnp.dot(w_big_ref[...], x,
                preferred_element_type=jnp.float32)            # (C*P+C, TB)
    # Per-channel second moments E[x^2] for the InstanceNorm #1 variance.
    ex2 = jnp.dot(w_stats_ref[...], x * x,
                  preferred_element_type=jnp.float32)          # (C, TB)

    # Scale each channel block by rsqrt(var + eps) (the mean subtraction is
    # already folded into w_big), accumulating InstanceNorm #2 statistics in
    # the same pass.
    inv_C = 1.0 / C
    outs = []
    s1 = None
    s2 = None
    for c in range(C):                                         # static unroll
        m_c = y[CP + c:CP + c + 1, :]                          # (1, TB) E[x_c]
        v_c = ex2[c:c + 1, :] - m_c * m_c                      # biased variance
        out_c = y[c * P:(c + 1) * P, :] * jax.lax.rsqrt(v_c + EPS)  # (P, TB)
        outs.append(out_c)
        s1 = out_c if s1 is None else s1 + out_c
        s2 = out_c * out_c if s2 is None else s2 + out_c * out_c

    # InstanceNorm #2: normalize over channels per (pred step, batch).
    m2 = s1 * inv_C                                            # (P, TB)
    v2 = s2 * inv_C - m2 * m2
    inv2 = jax.lax.rsqrt(v2 + EPS)

    # Normalized candle features, concatenated along sublanes (P = 8 aligned).
    outn = jnp.concatenate([(o - m2) * inv2 for o in outs], axis=0)  # (C*P, TB)

    # Final predictor: two MXU matmuls, lane-dense (O, TB) result.  The band
    # term also carries the predictor bias (ones row in bands_ref).
    pred = jnp.dot(w_band_ref[...], bands_ref[...],
                   preferred_element_type=jnp.float32)         # (O, TB)
    pred = pred + jnp.dot(w_cand_ref[...], outn,
                          preferred_element_type=jnp.float32)
    pred_ref[...] = pred


@partial(jax.jit, static_argnames=("kernel_size",))
def dlinear_forward(candle, band_center, band_upper, band_lower, params, *,
                    kernel_size):
    B, T, C = candle.shape
    P = params["ws"].shape[0]
    O = params["wp"].shape[0]
    L = band_center.shape[1]
    L3 = 3 * L
    f32 = jnp.float32

    # The torch module only works for odd kernel sizes (even sizes produce a
    # length-(T-1) trend and crash in the residue subtraction).
    assert kernel_size % 2 == 1, "moving_avg kernel_size must be odd"

    # ---- host-side weight folding (tiny; fused under jit) -------------------
    A = _moving_avg_matrix(T, kernel_size)                        # (T, T)
    ws = params["ws"].astype(f32)                                 # (P, T)
    wt = params["wt"].astype(f32)                                 # (P, T)
    eye_t = jnp.eye(T, dtype=f32)
    w_enc = ws @ (eye_t - A) + wt @ A                             # (P, T)
    # Fold InstanceNorm #1's mean subtraction into the weight (rows sum to 0):
    #   w_enc @ (x - mean(x)) == (w_enc - rowsum(w_enc)/T) @ x
    w_enc_c = w_enc - jnp.sum(w_enc, axis=1, keepdims=True) / T   # (P, T)
    # b_enc (bs + bt) is dropped: it is identical across channels, so the
    # channel-mean subtraction of InstanceNorm #2 cancels it exactly.

    eye_c = jnp.eye(C, dtype=f32)
    mean_row = jnp.full((1, T), 1.0 / T, f32)
    w_big = jnp.concatenate(
        [jnp.kron(eye_c, w_enc_c),                                # (C*P, C*T)
         jnp.kron(eye_c, mean_row)], axis=0)                      # (+C rows)
    w_stats = jnp.kron(eye_c, mean_row)                           # (C, C*T)

    wp = params["wp"].astype(f32)                                 # (O, C*P+3L)
    bp = params["bp"].astype(f32).reshape(O, 1)
    # torch flattens output.view(B, C*P) c-major -> column index c*P + p,
    # which matches the row order of the in-kernel outn block directly.
    w_cand = wp[:, :C * P]                                        # (O, C*P)
    # band weights + predictor bias folded in as an extra column (ones row
    # appended to the band features below).
    w_band = jnp.concatenate([wp[:, C * P:], bp], axis=1)         # (O, 3L+1)

    # ---- data layout: batch on lanes, tile sized for HBM roofline ------------
    LANE = 128
    MAX_TB = 4096                  # sweepable; working set stays << VMEM
    b128 = _round_up(B, LANE)
    if b128 <= MAX_TB:
        TB = b128                  # single tile for small batches
    else:
        # Large batch: keep tiles <= MAX_TB and balance them so the grid has
        # >= 2 steps (dual-TensorCore sharding on v7x / megacore).
        n_tiles = -(-b128 // MAX_TB)
        TB = _round_up(-(-b128 // n_tiles), LANE)
    Bp = _round_up(B, TB)
    grid = (Bp // TB,)

    # Candle relayout: (B,T,C) -> (C,T,B) -> (C*T,B); the reshape is
    # metadata-only and cast/transpose/pad fuse into one pass under jit.
    cand = jnp.transpose(candle.astype(f32), (2, 1, 0)).reshape(C * T, B)
    if Bp != B:
        cand = jnp.pad(cand, ((0, 0), (0, Bp - B)))               # (C*T, Bp)

    bands = jnp.concatenate(
        [band_center, band_upper, band_lower], axis=-1).astype(f32)
    bands = jnp.transpose(bands)                                  # (3L, B)
    if Bp != B:
        bands = jnp.pad(bands, ((0, 0), (0, Bp - B)))
    bands = jnp.concatenate(
        [bands, jnp.ones((1, Bp), f32)], axis=0)                  # (3L+1, Bp)

    pred = pl.pallas_call(
        _dlinear_kernel,
        out_shape=jax.ShapeDtypeStruct((O, Bp), jnp.float32),
        grid=grid,
        in_specs=[
            pl.BlockSpec((C * T, TB), lambda i: (0, i)),          # candle
            pl.BlockSpec((L3 + 1, TB), lambda i: (0, i)),         # bands+ones
            pl.BlockSpec((C * P + C, C * T), lambda i: (0, 0)),   # w_big
            pl.BlockSpec((C, C * T), lambda i: (0, 0)),           # w_stats
            pl.BlockSpec((O, C * P), lambda i: (0, 0)),           # w_cand
            pl.BlockSpec((O, L3 + 1), lambda i: (0, 0)),          # w_band(+b)
        ],
        out_specs=pl.BlockSpec((O, TB), lambda i: (0, i)),
        compiler_params=pltpu.CompilerParams(
            dimension_semantics=("parallel",)),
    )(cand, bands, w_big, w_stats, w_cand, w_band)

    out = jnp.transpose(pred[:, :B])                              # (B, O)
    if O == 1:
        out = out[:, 0]   # torch: .squeeze(-1)
    return out


def dlinear_reference(candle, band_center, band_upper, band_lower, params, *,
                      kernel_size):
    """Pure-JAX replica of the PyTorch forward (eval mode) for verification."""
    B, T, C = candle.shape
    # InstanceNorm1d(input_ch) over time per channel.
    x = jnp.transpose(candle, (0, 2, 1))                      # (B, C, T)
    m = x.mean(-1, keepdims=True)
    v = ((x - m) ** 2).mean(-1, keepdims=True)
    x = (x - m) / jnp.sqrt(v + EPS)
    x = jnp.transpose(x, (0, 2, 1))                           # (B, T, C)
    # SeriesDecomp / MovingAvg.
    pad = (kernel_size - 1) // 2
    xp = jnp.concatenate(
        [jnp.repeat(x[:, :1], pad, axis=1), x,
         jnp.repeat(x[:, -1:], pad, axis=1)], axis=1)
    trend = sum(xp[:, j:j + T] for j in range(kernel_size)) / kernel_size
    seasonal = x - trend
    seasonal_x = jnp.transpose(seasonal, (0, 2, 1))           # (B, C, T)
    trend_x = jnp.transpose(trend, (0, 2, 1))
    so = seasonal_x @ params["ws"].T + params["bs"]           # (B, C, P)
    to = trend_x @ params["wt"].T + params["bt"]
    out = so + to
    # InstanceNorm1d(pred_len) over channels per pred step.
    o = jnp.transpose(out, (0, 2, 1))                         # (B, P, C)
    m2 = o.mean(-1, keepdims=True)
    v2 = ((o - m2) ** 2).mean(-1, keepdims=True)
    o = (o - m2) / jnp.sqrt(v2 + EPS)
    out = jnp.transpose(o, (0, 2, 1))                         # (B, C, P)
    feat = jnp.concatenate(
        [out.reshape(B, -1), band_center, band_upper, band_lower], axis=-1)
    pred = feat @ params["wp"].T + params["bp"]               # (B, O)
    return pred[:, 0] if pred.shape[-1] == 1 else pred


if __name__ == "__main__":
    # Small shapes consistent with the module.
    B = 2
    seq_len = 16
    pred_len = 8
    input_ch = 4
    lookback_days = 8
    moving_avg_kernel_size = 5
    output_num = 1
    feat_dim = pred_len * input_ch + 3 * lookback_days

    key = jax.random.PRNGKey(0)
    keys = jax.random.split(key, 8)

    candle = jax.random.normal(keys[0], (B, seq_len, input_ch), jnp.float32)
    band_center = jax.random.normal(keys[1], (B, lookback_days), jnp.float32)
    band_upper = jax.random.normal(keys[2], (B, lookback_days), jnp.float32)
    band_lower = jax.random.normal(keys[3], (B, lookback_days), jnp.float32)

    # Deterministic parameter init.  Seasonal/trend weights are set to
    # 1/seq_len * ones exactly as in the module's __init__.
    lin_bound = 1.0 / (seq_len ** 0.5)
    pred_bound = 1.0 / (feat_dim ** 0.5)
    params = {
        "ws": jnp.full((pred_len, seq_len), 1.0 / seq_len, jnp.float32),
        "wt": jnp.full((pred_len, seq_len), 1.0 / seq_len, jnp.float32),
        "bs": jax.random.uniform(keys[4], (pred_len,), jnp.float32,
                                 -lin_bound, lin_bound),
        "bt": jax.random.uniform(keys[5], (pred_len,), jnp.float32,
                                 -lin_bound, lin_bound),
        "wp": jax.random.uniform(keys[6], (output_num, feat_dim), jnp.float32,
                                 -pred_bound, pred_bound),
        "bp": jax.random.uniform(keys[7], (output_num,), jnp.float32,
                                 -pred_bound, pred_bound),
    }

    pred = dlinear_forward(candle, band_center, band_upper, band_lower, params,
                           kernel_size=moving_avg_kernel_size)
    pred = jax.block_until_ready(pred)

    ref = dlinear_reference(candle, band_center, band_upper, band_lower, params,
                            kernel_size=moving_avg_kernel_size)
    ref = jax.block_until_ready(ref)

    assert pred.shape == ref.shape == (B,), (pred.shape, ref.shape)
    assert jnp.allclose(pred, ref, atol=1e-4, rtol=1e-4), (pred, ref)
    print("KERNEL_OK")
</pallas_src>

<mosaic_0001>
module attributes {stable_mosaic.version = 11 : i64} {
  func.func @_dlinear_kernel(%arg0: i32, %arg1: memref<64x128xf32, #tpu.memory_space<vmem>>, %arg2: memref<25x128xf32, #tpu.memory_space<vmem>>, %arg3: memref<36x64xf32, #tpu.memory_space<vmem>>, %arg4: memref<4x64xf32, #tpu.memory_space<vmem>>, %arg5: memref<1x32xf32, #tpu.memory_space<vmem>>, %arg6: memref<1x25xf32, #tpu.memory_space<vmem>>, %arg7: memref<1x128xf32, #tpu.memory_space<vmem>>) attributes {dimension_semantics = [#tpu.dimension_semantics<parallel>], iteration_bounds = array<i64: 1>, scalar_prefetch = 0 : i64, scratch_operands = 0 : i64, tpu.core_type = #tpu.core_type<tc>, window_params = [{transform_indices = @transform_0, window_bounds = array<i64: 64, 128>}, {transform_indices = @transform_1, window_bounds = array<i64: 25, 128>}, {pipeline_mode = #tpu.pipeline_mode<synchronous>, transform_indices = @transform_2, window_bounds = array<i64: 36, 64>}, {pipeline_mode = #tpu.pipeline_mode<synchronous>, transform_indices = @transform_3, window_bounds = array<i64: 4, 64>}, {pipeline_mode = #tpu.pipeline_mode<synchronous>, transform_indices = @transform_4, window_bounds = array<i64: 1, 32>}, {pipeline_mode = #tpu.pipeline_mode<synchronous>, transform_indices = @transform_5, window_bounds = array<i64: 1, 25>}, {transform_indices = @transform_6, window_bounds = array<i64: 1, 128>}]} {
    %c0 = arith.constant 0 : index
    %c0_0 = arith.constant 0 : index
    %0 = vector.load %arg1[%c0, %c0_0] : memref<64x128xf32, #tpu.memory_space<vmem>>, vector<64x128xf32>
    %c0_1 = arith.constant 0 : index
    %c0_2 = arith.constant 0 : index
    %1 = vector.load %arg3[%c0_1, %c0_2] : memref<36x64xf32, #tpu.memory_space<vmem>>, vector<36x64xf32>
    %cst = arith.constant dense<0.000000e+00> : vector<36x128xf32>
    %2 = tpu.matmul %1, %0, %cst {dimension_numbers = #tpu.dot_dimension_numbers<[1], [0], [0], [1], [0, 0, 1, 1], [], []>} : vector<36x64xf32>, vector<64x128xf32>, vector<36x128xf32> -> vector<36x128xf32>
    %c0_3 = arith.constant 0 : index
    %c0_4 = arith.constant 0 : index
    %3 = vector.load %arg4[%c0_3, %c0_4] : memref<4x64xf32, #tpu.memory_space<vmem>>, vector<4x64xf32>
    %4 = arith.mulf %0, %0 : vector<64x128xf32>
    %cst_5 = arith.constant dense<0.000000e+00> : vector<4x128xf32>
    %5 = tpu.matmul %3, %4, %cst_5 {dimension_numbers = #tpu.dot_dimension_numbers<[1], [0], [0], [1], [0, 0, 1, 1], [], []>} : vector<4x64xf32>, vector<64x128xf32>, vector<4x128xf32> -> vector<4x128xf32>
    %6 = vector.extract_strided_slice %2 {offsets = [32, 0], sizes = [1, 128], strides = [1, 1]} : vector<36x128xf32> to vector<1x128xf32>
    %7 = vector.extract_strided_slice %5 {offsets = [0, 0], sizes = [1, 128], strides = [1, 1]} : vector<4x128xf32> to vector<1x128xf32>
    %8 = arith.mulf %6, %6 : vector<1x128xf32>
    %9 = arith.subf %7, %8 : vector<1x128xf32>
    %10 = vector.extract_strided_slice %2 {offsets = [0, 0], sizes = [8, 128], strides = [1, 1]} : vector<36x128xf32> to vector<8x128xf32>
    %cst_6 = arith.constant 9.99999974E-6 : f32
    %11 = vector.broadcast %cst_6 : f32 to vector<1x128xf32>
    %12 = arith.addf %9, %11 : vector<1x128xf32>
    %13 = math.rsqrt %12 : vector<1x128xf32>
    %14 = vector.broadcast %13 : vector<1x128xf32> to vector<8x128xf32>
    %15 = arith.mulf %10, %14 : vector<8x128xf32>
    %16 = arith.mulf %15, %15 : vector<8x128xf32>
    %17 = vector.extract_strided_slice %2 {offsets = [33, 0], sizes = [1, 128], strides = [1, 1]} : vector<36x128xf32> to vector<1x128xf32>
    %18 = vector.extract_strided_slice %5 {offsets = [1, 0], sizes = [1, 128], strides = [1, 1]} : vector<4x128xf32> to vector<1x128xf32>
    %19 = arith.mulf %17, %17 : vector<1x128xf32>
    %20 = arith.subf %18, %19 : vector<1x128xf32>
    %21 = vector.extract_strided_slice %2 {offsets = [8, 0], sizes = [8, 128], strides = [1, 1]} : vector<36x128xf32> to vector<8x128xf32>
    %cst_7 = arith.constant 9.99999974E-6 : f32
    %22 = vector.broadcast %cst_7 : f32 to vector<1x128xf32>
    %23 = arith.addf %20, %22 : vector<1x128xf32>
    %24 = math.rsqrt %23 : vector<1x128xf32>
    %25 = vector.broadcast %24 : vector<1x128xf32> to vector<8x128xf32>
    %26 = arith.mulf %21, %25 : vector<8x128xf32>
    %27 = arith.addf %15, %26 : vector<8x128xf32>
    %28 = arith.mulf %26, %26 : vector<8x128xf32>
    %29 = arith.addf %16, %28 : vector<8x128xf32>
    %30 = vector.extract_strided_slice %2 {offsets = [34, 0], sizes = [1, 128], strides = [1, 1]} : vector<36x128xf32> to vector<1x128xf32>
    %31 = vector.extract_strided_slice %5 {offsets = [2, 0], sizes = [1, 128], strides = [1, 1]} : vector<4x128xf32> to vector<1x128xf32>
    %32 = arith.mulf %30, %30 : vector<1x128xf32>
    %33 = arith.subf %31, %32 : vector<1x128xf32>
    %34 = vector.extract_strided_slice %2 {offsets = [16, 0], sizes = [8, 128], strides = [1, 1]} : vector<36x128xf32> to vector<8x128xf32>
    %cst_8 = arith.constant 9.99999974E-6 : f32
    %35 = vector.broadcast %cst_8 : f32 to vector<1x128xf32>
    %36 = arith.addf %33, %35 : vector<1x128xf32>
    %37 = math.rsqrt %36 : vector<1x128xf32>
    %38 = vector.broadcast %37 : vector<1x128xf32> to vector<8x128xf32>
    %39 = arith.mulf %34, %38 : vector<8x128xf32>
    %40 = arith.addf %27, %39 : vector<8x128xf32>
    %41 = arith.mulf %39, %39 : vector<8x128xf32>
    %42 = arith.addf %29, %41 : vector<8x128xf32>
    %43 = vector.extract_strided_slice %2 {offsets = [35, 0], sizes = [1, 128], strides = [1, 1]} : vector<36x128xf32> to vector<1x128xf32>
    %44 = vector.extract_strided_slice %5 {offsets = [3, 0], sizes = [1, 128], strides = [1, 1]} : vector<4x128xf32> to vector<1x128xf32>
    %45 = arith.mulf %43, %43 : vector<1x128xf32>
    %46 = arith.subf %44, %45 : vector<1x128xf32>
    %47 = vector.extract_strided_slice %2 {offsets = [24, 0], sizes = [8, 128], strides = [1, 1]} : vector<36x128xf32> to vector<8x128xf32>
    %cst_9 = arith.constant 9.99999974E-6 : f32
    %48 = vector.broadcast %cst_9 : f32 to vector<1x128xf32>
    %49 = arith.addf %46, %48 : vector<1x128xf32>
    %50 = math.rsqrt %49 : vector<1x128xf32>
    %51 = vector.broadcast %50 : vector<1x128xf32> to vector<8x128xf32>
    %52 = arith.mulf %47, %51 : vector<8x128xf32>
    %53 = arith.addf %40, %52 : vector<8x128xf32>
    %54 = arith.mulf %52, %52 : vector<8x128xf32>
    %55 = arith.addf %42, %54 : vector<8x128xf32>
    %cst_10 = arith.constant 2.500000e-01 : f32
    %56 = vector.broadcast %cst_10 : f32 to vector<8x128xf32>
    %57 = arith.mulf %53, %56 : vector<8x128xf32>
    %cst_11 = arith.constant 2.500000e-01 : f32
    %58 = vector.broadcast %cst_11 : f32 to vector<8x128xf32>
    %59 = arith.mulf %55, %58 : vector<8x128xf32>
    %60 = arith.mulf %57, %57 : vector<8x128xf32>
    %61 = arith.subf %59, %60 : vector<8x128xf32>
    %cst_12 = arith.constant 9.99999974E-6 : f32
    %62 = vector.broadcast %cst_12 : f32 to vector<8x128xf32>
    %63 = arith.addf %61, %62 : vector<8x128xf32>
    %64 = math.rsqrt %63 : vector<8x128xf32>
    %65 = arith.subf %15, %57 : vector<8x128xf32>
    %66 = arith.mulf %65, %64 : vector<8x128xf32>
    %67 = arith.subf %26, %57 : vector<8x128xf32>
    %68 = arith.mulf %67, %64 : vector<8x128xf32>
    %69 = arith.subf %39, %57 : vector<8x128xf32>
    %70 = arith.mulf %69, %64 : vector<8x128xf32>
    %71 = arith.subf %52, %57 : vector<8x128xf32>
    %72 = arith.mulf %71, %64 : vector<8x128xf32>
    %73 = tpu.concatenate %66, %68, %70, %72 in 0 : vector<8x128xf32>, vector<8x128xf32>, vector<8x128xf32>, vector<8x128xf32> -> vector<32x128xf32>
    %c0_13 = arith.constant 0 : index
    %c0_14 = arith.constant 0 : index
    %74 = vector.load %arg6[%c0_13, %c0_14] : memref<1x25xf32, #tpu.memory_space<vmem>>, vector<1x25xf32>
    %c0_15 = arith.constant 0 : index
    %c0_16 = arith.constant 0 : index
    %75 = vector.load %arg2[%c0_15, %c0_16] : memref<25x128xf32, #tpu.memory_space<vmem>>, vector<25x128xf32>
    %cst_17 = arith.constant dense<0.000000e+00> : vector<1x128xf32>
    %76 = tpu.matmul %74, %75, %cst_17 {dimension_numbers = #tpu.dot_dimension_numbers<[1], [0], [0], [1], [0, 0, 1, 1], [], []>} : vector<1x25xf32>, vector<25x128xf32>, vector<1x128xf32> -> vector<1x128xf32>
    %c0_18 = arith.constant 0 : index
    %c0_19 = arith.constant 0 : index
    %77 = vector.load %arg5[%c0_18, %c0_19] : memref<1x32xf32, #tpu.memory_space<vmem>>, vector<1x32xf32>
    %cst_20 = arith.constant dense<0.000000e+00> : vector<1x128xf32>
    %78 = tpu.matmul %77, %73, %cst_20 {dimension_numbers = #tpu.dot_dimension_numbers<[1], [0], [0], [1], [0, 0, 1, 1], [], []>} : vector<1x32xf32>, vector<32x128xf32>, vector<1x128xf32> -> vector<1x128xf32>
    %79 = arith.addf %76, %78 : vector<1x128xf32>
    %c0_21 = arith.constant 0 : index
    %c0_22 = arith.constant 0 : index
    %80 = vector.load %arg7[%c0_21, %c0_22] : memref<1x128xf32, #tpu.memory_space<vmem>>, vector<1x128xf32>
    tpu.vector_store %arg7[%c0_21, %c0_22], %79 {strides = array<i32>} : memref<1x128xf32, #tpu.memory_space<vmem>>, vector<1x128xf32>,
    return
  }
  func.func @transform_0(%arg0: i32) -> (i32, i32) {
    %c0_i32 = arith.constant 0 : i32
    %c0_i32_0 = arith.constant 0 : i32
    return %c0_i32, %arg0 : i32, i32
  }
  func.func @transform_1(%arg0: i32) -> (i32, i32) {
    %c0_i32 = arith.constant 0 : i32
    %c0_i32_0 = arith.constant 0 : i32
    return %c0_i32, %arg0 : i32, i32
  }
  func.func @transform_2(%arg0: i32) -> (i32, i32) {
    %c0_i32 = arith.constant 0 : i32
    %c0_i32_0 = arith.constant 0 : i32
    %c0_i32_1 = arith.constant 0 : i32
    return %c0_i32, %c0_i32_0 : i32, i32
  }
  func.func @transform_3(%arg0: i32) -> (i32, i32) {
    %c0_i32 = arith.constant 0 : i32
    %c0_i32_0 = arith.constant 0 : i32
    %c0_i32_1 = arith.constant 0 : i32
    return %c0_i32, %c0_i32_0 : i32, i32
  }
  func.func @transform_4(%arg0: i32) -> (i32, i32) {
    %c0_i32 = arith.constant 0 : i32
    %c0_i32_0 = arith.constant 0 : i32
    %c0_i32_1 = arith.constant 0 : i32
    return %c0_i32, %c0_i32_0 : i32, i32
  }
  func.func @transform_5(%arg0: i32) -> (i32, i32) {
    %c0_i32 = arith.constant 0 : i32
    %c0_i32_0 = arith.constant 0 : i32
    %c0_i32_1 = arith.constant 0 : i32
    return %c0_i32, %c0_i32_0 : i32, i32
  }
  func.func @transform_6(%arg0: i32) -> (i32, i32) {
    %c0_i32 = arith.constant 0 : i32
    %c0_i32_0 = arith.constant 0 : i32
    return %c0_i32, %arg0 : i32, i32
  }
}

</mosaic_0001>

<llo_original>
// kernel: dlinear_forward.1
$region0: #{dlinear_forward.1}
  #allocation0 [shape = 'u32[]', space=smem, size = 0x4, offset = 0x4, fixed_abs, tag = 'smem constant byte address 0x4 - core index']
  #allocation1 [shape = 'u32[144,128]{1,0:T(1,128)}', space=vmem, size = 0x12000, scoped, tag = 'internal scratch']
  %s0 = inlined_call_operand.vmem [shape: f32[64,128], index: 0, kind: input, shape index: {}]
  %s1 = inlined_call_operand.vmem [shape: f32[25,128], index: 1, kind: input, shape index: {}]
  %s2 = inlined_call_operand.vmem [shape: f32[36,64], index: 2, kind: input, shape index: {}]
  %s3 = inlined_call_operand.vmem [shape: f32[4,64], index: 3, kind: input, shape index: {}]
  %s4 = inlined_call_operand.vmem [shape: f32[1,32], index: 4, kind: input, shape index: {}]
  %s5 = inlined_call_operand.vmem [shape: f32[1,25], index: 5, kind: input, shape index: {}]
  %s6 = inlined_call_operand.vmem [shape: f32[1,128], index: 6, kind: output, shape index: {}]
  %s7 = sld [smem:[#allocation0]]
  $region34: #{dlinear_forward.1} parent=0
    _
  %s9 = ssub.s32 1, %s7
  %s10 = scalar_select 0, %s9, %s7
  // Predicated region
  $region2: #{dlinear_forward.1} parent=0 // pred_check
    _
  $region3: #{dlinear_forward.1} parent=0 // pred_check_branch
    %12 = sbr.rel (0) target = $region5
  $region4: #{dlinear_forward.1} parent=0 // pred_region
    _
  $region5: #{dlinear_forward.1} parent=0 // pred_fallthru
    _
  // Predicated region
  $region6: #{dlinear_forward.1} parent=0 // pred_check
    _
  $region7: #{dlinear_forward.1} parent=0 // pred_check_branch
    %14 = sbr.rel (0) target = $region9
  $region8: #{dlinear_forward.1} parent=0 // pred_region
    _
  $region9: #{dlinear_forward.1} parent=0 // pred_fallthru
    _
  // Predicated region
  $region10: #{dlinear_forward.1} parent=0 // pred_check
    _
  $region11: #{dlinear_forward.1} parent=0 // pred_check_branch
    %16 = sbr.rel (0) target = $region13
  $region12: #{dlinear_forward.1} parent=0 // pred_region
    _
  $region13: #{dlinear_forward.1} parent=0 // pred_fallthru
    _
  // Predicated region
  $region14: #{dlinear_forward.1} parent=0 // pred_check
    _
  $region15: #{dlinear_forward.1} parent=0 // pred_check_branch
    %18 = sbr.rel (0) target = $region17
  $region16: #{dlinear_forward.1} parent=0 // pred_region
    _
  $region17: #{dlinear_forward.1} parent=0 // pred_fallthru
    _
  // Predicated region
  $region18: #{dlinear_forward.1} parent=0 // pred_check
    _
  $region19: #{dlinear_forward.1} parent=0 // pred_check_branch
    %20 = sbr.rel (0) target = $region21
  $region20: #{dlinear_forward.1} parent=0 // pred_region
    _
  $region21: #{dlinear_forward.1} parent=0 // pred_fallthru
    _
  // Predicated region
  $region22: #{dlinear_forward.1} parent=0 // pred_check
    _
  $region23: #{dlinear_forward.1} parent=0 // pred_check_branch
    %22 = sbr.rel (0) target = $region25
  $region24: #{dlinear_forward.1} parent=0 // pred_region
    _
  $region25: #{dlinear_forward.1} parent=0 // pred_fallthru
    _
  %v23 = vld [vmem:[%s0] sm:$0xff]
  %v24 = vld [vmem:[%s0 + $0x8] sm:$0xff]
  %v25 = vld [vmem:[%s0 + $0x10] sm:$0xff]
  %v26 = vld [vmem:[%s0 + $0x18] sm:$0xff]
  %v27 = vld [vmem:[%s0 + $0x20] sm:$0xff]
  %v28 = vld [vmem:[%s0 + $0x28] sm:$0xff]
  %v29 = vld [vmem:[%s0 + $0x30] sm:$0xff]
  %v30 = vld [vmem:[%s0 + $0x38] sm:$0xff]
  %v31 = vld [vmem:[%s2] sm:$0xff]
  %v32 = vld [vmem:[%s2 + $0x8] sm:$0xff]
  %v33 = vld [vmem:[%s2 + $0x10] sm:$0xff]
  %v34 = vld [vmem:[%s2 + $0x18] sm:$0xff]
  %v35 = vld [vmem:[%s2 + $0x20] sm:$0xf]
  %vm36 = vcmask 523264
  %v38 = vsel %vm36, %v31, 0
  %v41 = vsel %vm36, %v32, 0
  %v44 = vsel %vm36, %v33, 0
  %v47 = vsel %vm36, %v34, 0
  %v50 = vsel %vm36, %v35, 0
  %52 = vmatprep.subr.mxu0 0.0
  %53 = vmatpush1.msra.mxu0 0.0
  %54 = vmatprep.subr.mxu0 0.0
  %55 = vmatpush1.msra.mxu0 0.0
  %56 = vmatprep.subr.mxu0 0.0
  %57 = vmatpush1.msra.mxu0 0.0
  %58 = vmatprep.subr.mxu0 0.0
  %59 = vmatpush1.msra.mxu0 0.0
  %60 = vmatprep.subr.mxu0 0.0
  %61 = vmatpush1.msra.mxu0 0.0
  %62 = vmatprep.subr.mxu0 0.0
  %63 = vmatpush1.msra.mxu0 0.0
  %64 = vmatprep.subr.mxu0 0.0
  %65 = vmatpush1.msra.mxu0 0.0
  %66 = vmatprep.subr.mxu0 0.0
  %67 = vmatpush1.msra.mxu0 0.0
  %68 = vmatprep.subr.mxu0 0.0
  %69 = vmatpush1.msra.mxu0 %v30
  %70 = vmatprep.subr.mxu0 0.0
  %71 = vmatpush1.msra.mxu0 %v29
  %72 = vmatprep.subr.mxu0 0.0
  %73 = vmatpush1.msra.mxu0 %v28
  %74 = vmatprep.subr.mxu0 0.0
  %75 = vmatpush1.msra.mxu0 %v27
  %76 = vmatprep.subr.mxu0 0.0
  %77 = vmatpush1.msra.mxu0 %v26
  %78 = vmatprep.subr.mxu0 0.0
  %79 = vmatpush1.msra.mxu0 %v25
  %80 = vmatprep.subr.mxu0 0.0
  %81 = vmatpush1.msra.mxu0 %v24
  %82 = vmatprep.subr.mxu0 0.0
  %83 = vmatpush1.msra.mxu0 %v23
  %84 = vmatprep.subr.mxu0 0.0
  %85 = vmatpush2.msra.mxu0 0.0
  %86 = vmatprep.subr.mxu0 0.0
  %87 = vmatpush2.msra.mxu0 0.0
  %88 = vmatprep.subr.mxu0 0.0
  %89 = vmatpush2.msra.mxu0 0.0
  %90 = vmatprep.subr.mxu0 0.0
  %91 = vmatpush2.msra.mxu0 0.0
  %92 = vmatprep.subr.mxu0 0.0
  %93 = vmatpush2.msra.mxu0 0.0
  %94 = vmatprep.subr.mxu0 0.0
  %95 = vmatpush2.msra.mxu0 0.0
  %96 = vmatprep.subr.mxu0 0.0
  %97 = vmatpush2.msra.mxu0 0.0
  %98 = vmatprep.subr.mxu0 0.0
  %99 = vmatpush2.msra.mxu0 0.0
  %100 = vmatprep.subr.mxu0 0.0
  %101 = vmatpush2.msra.mxu0 0.0
  %102 = vmatprep.subr.mxu0 0.0
  %103 = vmatpush2.msra.mxu0 0.0
  %104 = vmatprep.subr.mxu0 0.0
  %105 = vmatpush2.msra.mxu0 0.0
  %106 = vmatprep.subr.mxu0 0.0
  %107 = vmatpush2.msra.mxu0 0.0
  %108 = vmatprep.subr.mxu0 0.0
  %109 = vmatpush2.msra.mxu0 0.0
  %110 = vmatprep.subr.mxu0 0.0
  %111 = vmatpush2.msra.mxu0 0.0
  %112 = vmatprep.subr.mxu0 0.0
  %113 = vmatpush2.msra.mxu0 0.0
  %114 = vmatprep.subr.mxu0 0.0
  %115 = vmatpush2.msra.mxu0 0.0
  %116 = vmatprep.mubr.f32.mxu0 0.0
  %117 = vmatmul.mubr.f32.gmra.mxu0 %v38
  %v118 = vpop.f32.mrf.mxu0
  %v119 = vadd.f32 0.0, %v118
  %v120 = vpop.f32.mrf.mxu0
  %121 = vmatprep.mubr.f32.mxu0 0.0
  %122 = vmatmul.mubr.f32.gmra.mxu0 %v41
  %v123 = vpop.f32.mrf.mxu0
  %v124 = vadd.f32 0.0, %v123
  %v125 = vpop.f32.mrf.mxu0
  %126 = vmatprep.mubr.f32.mxu0 0.0
  %127 = vmatmul.mubr.f32.gmra.mxu0 %v44
  %v128 = vpop.f32.mrf.mxu0
  %v129 = vadd.f32 0.0, %v128
  %v130 = vpop.f32.mrf.mxu0
  %131 = vmatprep.mubr.f32.mxu0 0.0
  %132 = vmatmul.mubr.f32.gmra.mxu0 %v47
  %v133 = vpop.f32.mrf.mxu0
  %v134 = vadd.f32 0.0, %v133
  %v135 = vpop.f32.mrf.mxu0
  %136 = vmatprep.mubr.f32.mxu0 0.0
  %137 = vmatmul.mubr.f32.gmra.mxu0 %v50
  %v138 = vpop.f32.mrf.mxu0
  %v139 = vadd.f32 0.0, %v138
  %v140 = vpop.f32.mrf.mxu0
  %141 = vdwg.mxu0
  %v142 = vld [vmem:[%s3] sm:$0xf]
  %v143 = vmul.f32 %v23, %v23
  %v144 = vmul.f32 %v24, %v24
  %v145 = vmul.f32 %v25, %v25
  %v146 = vmul.f32 %v26, %v26
  %v147 = vmul.f32 %v27, %v27
  %v148 = vmul.f32 %v28, %v28
  %v149 = vmul.f32 %v29, %v29
  %v150 = vmul.f32 %v30, %v30
  %v152 = vsel %vm36, %v142, 0
  %154 = vmatprep.subr.mxu0 0.0
  %155 = vmatpush1.msra.mxu0 0.0
  %156 = vmatprep.subr.mxu0 0.0
  %157 = vmatpush1.msra.mxu0 0.0
  %158 = vmatprep.subr.mxu0 0.0
  %159 = vmatpush1.msra.mxu0 0.0
  %160 = vmatprep.subr.mxu0 0.0
  %161 = vmatpush1.msra.mxu0 0.0
  %162 = vmatprep.subr.mxu0 0.0
  %163 = vmatpush1.msra.mxu0 0.0
  %164 = vmatprep.subr.mxu0 0.0
  %165 = vmatpush1.msra.mxu0 0.0
  %166 = vmatprep.subr.mxu0 0.0
  %167 = vmatpush1.msra.mxu0 0.0
  %168 = vmatprep.subr.mxu0 0.0
  %169 = vmatpush1.msra.mxu0 0.0
  %170 = vmatprep.subr.mxu0 0.0
  %171 = vmatpush1.msra.mxu0 %v150
  %172 = vmatprep.subr.mxu0 0.0
  %173 = vmatpush1.msra.mxu0 %v149
  %174 = vmatprep.subr.mxu0 0.0
  %175 = vmatpush1.msra.mxu0 %v148
  %176 = vmatprep.subr.mxu0 0.0
  %177 = vmatpush1.msra.mxu0 %v147
  %178 = vmatprep.subr.mxu0 0.0
  %179 = vmatpush1.msra.mxu0 %v146
  %180 = vmatprep.subr.mxu0 0.0
  %181 = vmatpush1.msra.mxu0 %v145
  %182 = vmatprep.subr.mxu0 0.0
  %183 = vmatpush1.msra.mxu0 %v144
  %184 = vmatprep.subr.mxu0 0.0
  %185 = vmatpush1.msra.mxu0 %v143
  %186 = vmatprep.subr.mxu0 0.0
  %187 = vmatpush2.msra.mxu0 0.0
  %188 = vmatprep.subr.mxu0 0.0
  %189 = vmatpush2.msra.mxu0 0.0
  %190 = vmatprep.subr.mxu0 0.0
  %191 = vmatpush2.msra.mxu0 0.0
  %192 = vmatprep.subr.mxu0 0.0
  %193 = vmatpush2.msra.mxu0 0.0
  %194 = vmatprep.subr.mxu0 0.0
  %195 = vmatpush2.msra.mxu0 0.0
  %196 = vmatprep.subr.mxu0 0.0
  %197 = vmatpush2.msra.mxu0 0.0
  %198 = vmatprep.subr.mxu0 0.0
  %199 = vmatpush2.msra.mxu0 0.0
  %200 = vmatprep.subr.mxu0 0.0
  %201 = vmatpush2.msra.mxu0 0.0
  %202 = vmatprep.subr.mxu0 0.0
  %203 = vmatpush2.msra.mxu0 0.0
  %204 = vmatprep.subr.mxu0 0.0
  %205 = vmatpush2.msra.mxu0 0.0
  %206 = vmatprep.subr.mxu0 0.0
  %207 = vmatpush2.msra.mxu0 0.0
  %208 = vmatprep.subr.mxu0 0.0
  %209 = vmatpush2.msra.mxu0 0.0
  %210 = vmatprep.subr.mxu0 0.0
  %211 = vmatpush2.msra.mxu0 0.0
  %212 = vmatprep.subr.mxu0 0.0
  %213 = vmatpush2.msra.mxu0 0.0
  %214 = vmatprep.subr.mxu0 0.0
  %215 = vmatpush2.msra.mxu0 0.0
  %216 = vmatprep.subr.mxu0 0.0
  %217 = vmatpush2.msra.mxu0 0.0
  %218 = vmatprep.mubr.f32.mxu0 0.0
  %219 = vmatmul.mubr.f32.gmra.mxu0 %v152
  %v220 = vpop.f32.mrf.mxu0
  %v221 = vadd.f32 0.0, %v220
  %v222 = vpop.f32.mrf.mxu0
  %223 = vdwg.mxu0
  %v224 = vmul.f32 %v139, %v139
  %v225 = vsub.f32 %v221, %v224
  %v226 = vadd.f32 %v225, 1e-05
  %v227 = vrsqrt.pop %v226
  %v228 = vlaneseq
  %v229 = vshrl.u32 %v228, 7
  %v230 = vsub.s32 0, %v229
  %v231 = vrot.slane %v227, %v230
  %v232 = vmul.f32 %v119, %v231
  %v233 = vmul.f32 %v232, %v232
  %v234 = vlaneseq
  %v235 = vshrl.u32 %v234, 7
  %v236 = vsub.s32 1, %v235
  %v237 = vrot.slane %v227, %v236
  %v238 = vmul.f32 %v124, %v237
  %v239 = vadd.f32 %v232, %v238
  %v240 = vmul.f32 %v238, %v238
  %v241 = vadd.f32 %v233, %v240
  %v242 = vlaneseq
  %v243 = vshrl.u32 %v242, 7
  %v244 = vsub.s32 2, %v243
  %v245 = vrot.slane %v227, %v244
  %v246 = vmul.f32 %v129, %v245
  %v247 = vadd.f32 %v239, %v246
  %v248 = vmul.f32 %v246, %v246
  %v249 = vadd.f32 %v241, %v248
  %v250 = vlaneseq
  %v251 = vshrl.u32 %v250, 7
  %v252 = vsub.s32 3, %v251
  %v253 = vrot.slane %v227, %v252
  %v254 = vmul.f32 %v134, %v253
  %v255 = vadd.f32 %v247, %v254
  %v256 = vmul.f32 %v254, %v254
  %v257 = vadd.f32 %v249, %v256
  %v258 = vmul.f32 %v255, 0.25
  %v259 = vmul.f32 %v257, 0.25
  %v260 = vmul.f32 %v258, %v258
  %v261 = vsub.f32 %v259, %v260
  %v262 = vadd.f32 %v261, 1e-05
  %v263 = vrsqrt.pop %v262
  %v264 = vsub.f32 %v232, %v258
  %v265 = vmul.f32 %v264, %v263
  %v266 = vsub.f32 %v238, %v258
  %v267 = vmul.f32 %v266, %v263
  %v268 = vsub.f32 %v246, %v258
  %v269 = vmul.f32 %v268, %v263
  %v270 = vsub.f32 %v254, %v258
  %v271 = vmul.f32 %v270, %v263
  %v272 = vld [vmem:[%s5] sm:$0x1]
  %v273 = vld [vmem:[%s1] sm:$0xff]
  %v274 = vld [vmem:[%s1 + $0x8] sm:$0xff]
  %v275 = vld [vmem:[%s1 + $0x10] sm:$0xff]
  %v276 = vld [vmem:[%s1 + $0x18] sm:$0x1]
  %v277 = vld [vmem:[%s4] sm:$0x1]
  %vm278 = vcmask 261120
  %v280 = vsel %vm278, %v277, 0
  %282 = vmatprep.subr.mxu0 0.0
  %283 = vmatpush1.msra.mxu0 0.0
  %284 = vmatprep.subr.mxu0 0.0
  %285 = vmatpush1.msra.mxu0 0.0
  %286 = vmatprep.subr.mxu0 0.0
  %287 = vmatpush1.msra.mxu0 0.0
  %288 = vmatprep.subr.mxu0 0.0
  %289 = vmatpush1.msra.mxu0 0.0
  %290 = vmatprep.subr.mxu0 0.0
  %291 = vmatpush1.msra.mxu0 0.0
  %292 = vmatprep.subr.mxu0 0.0
  %293 = vmatpush1.msra.mxu0 0.0
  %294 = vmatprep.subr.mxu0 0.0
  %295 = vmatpush1.msra.mxu0 0.0
  %296 = vmatprep.subr.mxu0 0.0
  %297 = vmatpush1.msra.mxu0 0.0
  %298 = vmatprep.subr.mxu0 0.0
  %299 = vmatpush1.msra.mxu0 0.0
  %300 = vmatprep.subr.mxu0 0.0
  %301 = vmatpush1.msra.mxu0 0.0
  %302 = vmatprep.subr.mxu0 0.0
  %303 = vmatpush1.msra.mxu0 0.0
  %304 = vmatprep.subr.mxu0 0.0
  %305 = vmatpush1.msra.mxu0 0.0
  %306 = vmatprep.subr.mxu0 0.0
  %307 = vmatpush1.msra.mxu0 %v271
  %308 = vmatprep.subr.mxu0 0.0
  %309 = vmatpush1.msra.mxu0 %v269
  %310 = vmatprep.subr.mxu0 0.0
  %311 = vmatpush1.msra.mxu0 %v267
  %312 = vmatprep.subr.mxu0 0.0
  %313 = vmatpush1.msra.mxu0 %v265
  %314 = vmatprep.subr.mxu0 0.0
  %315 = vmatpush2.msra.mxu0 0.0
  %316 = vmatprep.subr.mxu0 0.0
  %317 = vmatpush2.msra.mxu0 0.0
  %318 = vmatprep.subr.mxu0 0.0
  %319 = vmatpush2.msra.mxu0 0.0
  %320 = vmatprep.subr.mxu0 0.0
  %321 = vmatpush2.msra.mxu0 0.0
  %322 = vmatprep.subr.mxu0 0.0
  %323 = vmatpush2.msra.mxu0 0.0
  %324 = vmatprep.subr.mxu0 0.0
  %325 = vmatpush2.msra.mxu0 0.0
  %326 = vmatprep.subr.mxu0 0.0
  %327 = vmatpush2.msra.mxu0 0.0
  %328 = vmatprep.subr.mxu0 0.0
  %329 = vmatpush2.msra.mxu0 0.0
  %330 = vmatprep.subr.mxu0 0.0
  %331 = vmatpush2.msra.mxu0 0.0
  %332 = vmatprep.subr.mxu0 0.0
  %333 = vmatpush2.msra.mxu0 0.0
  %334 = vmatprep.subr.mxu0 0.0
  %335 = vmatpush2.msra.mxu0 0.0
  %336 = vmatprep.subr.mxu0 0.0
  %337 = vmatpush2.msra.mxu0 0.0
  %338 = vmatprep.subr.mxu0 0.0
  %339 = vmatpush2.msra.mxu0 0.0
  %340 = vmatprep.subr.mxu0 0.0
  %341 = vmatpush2.msra.mxu0 0.0
  %342 = vmatprep.subr.mxu0 0.0
  %343 = vmatpush2.msra.mxu0 0.0
  %344 = vmatprep.subr.mxu0 0.0
  %345 = vmatpush2.msra.mxu0 0.0
  %346 = vmatprep.mubr.f32.mxu0 0.0
  %347 = vmatmul.mubr.f32.gmra.mxu0 %v280
  %v348 = vpop.f32.mrf.mxu0
  %v349 = vadd.f32 0.0, %v348
  %v350 = vpop.f32.mrf.mxu0
  %351 = vdwg.mxu0
  %vm352 = vcmask 203776
  %v354 = vsel %vm352, %v272, 0
  %vm356 = vcmask 1040384
  %v358 = vsel %vm356, %v276, 0
  %360 = vmatprep.subr.mxu0 0.0
  %361 = vmatpush1.msra.mxu0 0.0
  %362 = vmatprep.subr.mxu0 0.0
  %363 = vmatpush1.msra.mxu0 0.0
  %364 = vmatprep.subr.mxu0 0.0
  %365 = vmatpush1.msra.mxu0 0.0
  %366 = vmatprep.subr.mxu0 0.0
  %367 = vmatpush1.msra.mxu0 0.0
  %368 = vmatprep.subr.mxu0 0.0
  %369 = vmatpush1.msra.mxu0 0.0
  %370 = vmatprep.subr.mxu0 0.0
  %371 = vmatpush1.msra.mxu0 0.0
  %372 = vmatprep.subr.mxu0 0.0
  %373 = vmatpush1.msra.mxu0 0.0
  %374 = vmatprep.subr.mxu0 0.0
  %375 = vmatpush1.msra.mxu0 0.0
  %376 = vmatprep.subr.mxu0 0.0
  %377 = vmatpush1.msra.mxu0 0.0
  %378 = vmatprep.subr.mxu0 0.0
  %379 = vmatpush1.msra.mxu0 0.0
  %380 = vmatprep.subr.mxu0 0.0
  %381 = vmatpush1.msra.mxu0 0.0
  %382 = vmatprep.subr.mxu0 0.0
  %383 = vmatpush1.msra.mxu0 0.0
  %384 = vmatprep.subr.mxu0 0.0
  %385 = vmatpush1.msra.mxu0 %v358
  %386 = vmatprep.subr.mxu0 0.0
  %387 = vmatpush1.msra.mxu0 %v275
  %388 = vmatprep.subr.mxu0 0.0
  %389 = vmatpush1.msra.mxu0 %v274
  %390 = vmatprep.subr.mxu0 0.0
  %391 = vmatpush1.msra.mxu0 %v273
  %392 = vmatprep.subr.mxu0 0.0
  %393 = vmatpush2.msra.mxu0 0.0
  %394 = vmatprep.subr.mxu0 0.0
  %395 = vmatpush2.msra.mxu0 0.0
  %396 = vmatprep.subr.mxu0 0.0
  %397 = vmatpush2.msra.mxu0 0.0
  %398 = vmatprep.subr.mxu0 0.0
  %399 = vmatpush2.msra.mxu0 0.0
  %400 = vmatprep.subr.mxu0 0.0
  %401 = vmatpush2.msra.mxu0 0.0
  %402 = vmatprep.subr.mxu0 0.0
  %403 = vmatpush2.msra.mxu0 0.0
  %404 = vmatprep.subr.mxu0 0.0
  %405 = vmatpush2.msra.mxu0 0.0
  %406 = vmatprep.subr.mxu0 0.0
  %407 = vmatpush2.msra.mxu0 0.0
  %408 = vmatprep.subr.mxu0 0.0
  %409 = vmatpush2.msra.mxu0 0.0
  %410 = vmatprep.subr.mxu0 0.0
  %411 = vmatpush2.msra.mxu0 0.0
  %412 = vmatprep.subr.mxu0 0.0
  %413 = vmatpush2.msra.mxu0 0.0
  %414 = vmatprep.subr.mxu0 0.0
  %415 = vmatpush2.msra.mxu0 0.0
  %416 = vmatprep.subr.mxu0 0.0
  %417 = vmatpush2.msra.mxu0 0.0
  %418 = vmatprep.subr.mxu0 0.0
  %419 = vmatpush2.msra.mxu0 0.0
  %420 = vmatprep.subr.mxu0 0.0
  %421 = vmatpush2.msra.mxu0 0.0
  %422 = vmatprep.subr.mxu0 0.0
  %423 = vmatpush2.msra.mxu0 0.0
  %424 = vmatprep.mubr.f32.mxu0 0.0
  %425 = vmatmul.mubr.f32.gmra.mxu0 %v354
  %v426 = vpop.f32.mrf.mxu0
  %v427 = vadd.f32 %v349, %v426
  %v428 = vpop.f32.mrf.mxu0
  %429 = vdwg.mxu0
  %430 = vst [vmem:[%s6] sm:$0x1] %v427
  // Predicated region
  $region26: #{dlinear_forward.1} parent=0 // pred_check
    _
  $region27: #{dlinear_forward.1} parent=0 // pred_check_branch
    %432 = sbr.rel (0) target = $region29
  $region28: #{dlinear_forward.1} parent=0 // pred_region
    _
  $region29: #{dlinear_forward.1} parent=0 // pred_fallthru
    _
  // Predicated region
  $region30: #{dlinear_forward.1} parent=0 // pred_check
    _
  $region31: #{dlinear_forward.1} parent=0 // pred_check_branch
    %434 = sbr.rel (0) target = $region33
  $region32: #{dlinear_forward.1} parent=0 // pred_region
    _
  $region33: #{dlinear_forward.1} parent=0 // pred_fallthru
    _

</llo_original>
